<compile_context>
chip_gen: v7x
topology: tpu7x:2x2x1
jax: 0.10.0
libtpu: 0.0.40
codegen_flags: <defaults>
</compile_context>

<pallas_src>
import jax
import jax.numpy as jnp
from jax.experimental import pallas as pl
from jax.experimental.pallas import tpu as pltpu


# ---------------------------------------------------------------------------
# Kernels
# ---------------------------------------------------------------------------
def _scorer_dot_kernel_2d(cand_ref, rel_ref, out_ref):
    """Squeezed per-batch kernel.  cand: (TN, D), rel: (T, D), out: (T, TN)."""
    score = jax.lax.dot_general(
        rel_ref[...], cand_ref[...],
        dimension_numbers=(((1,), (1,)), ((), ())),   # contract over D
        preferred_element_type=jnp.float32,
    )
    out_ref[...] = score.astype(out_ref.dtype)


def _scorer_dot_kernel_batched(cand_ref, rel_ref, out_ref):
    """Batch-blocked kernel.  cand: (BB, TN, D), rel: (BB, T, D), out: (BB, T, TN)."""
    score = jnp.einsum(
        "btd,bnd->btn", rel_ref[...], cand_ref[...],
        preferred_element_type=jnp.float32,
    )
    out_ref[...] = score.astype(out_ref.dtype)


# ---------------------------------------------------------------------------
# Tile selection helpers
# ---------------------------------------------------------------------------
def _pick_n_tile(N, D, T, itemsize, budget_bytes=24 * (1 << 20)):
    """Largest 128-multiple N tile fitting a double-buffered VMEM budget.

    Prefers tiles that divide N exactly (no padded edge block); otherwise falls back to
    the largest fitting tile with a cdiv grid (Pallas masks the partial edge block).
    """
    if N <= 128:
        return N
    candidates = (2048, 1024, 512, 384, 256, 128)
    fitting = [
        tn for tn in candidates
        if tn <= N
        and 2 * itemsize * (tn * D + T * D + T * tn) + 4 * T * tn <= budget_bytes
    ]
    for tn in fitting:
        if N % tn == 0:
            return tn
    if fitting:
        return fitting[0]
    return N


def _pick_batch_block(B, N, T, tn):
    """Fold several batch items per grid step only when per-step work is tiny."""
    if tn == N and N <= 256 and T <= 128:
        for bb in (8, 4, 2):
            if B % bb == 0:
                return bb
    return 1


# ---------------------------------------------------------------------------
# Wrapper
# ---------------------------------------------------------------------------
@jax.jit
def scorer_layer_dot(candidate_pair_rep, rel_type_rep):
    """ScorerLayer(scoring_type='dot').forward as a Pallas TPU kernel.

    candidate_pair_rep: [B, N, D], rel_type_rep: [B, T, D] -> scores [B, N, T]
    """
    B, N, D = candidate_pair_rep.shape
    B2, T, D2 = rel_type_rep.shape
    assert B == B2 and D == D2

    dtype = candidate_pair_rep.dtype
    itemsize = jnp.dtype(dtype).itemsize

    tn = _pick_n_tile(N, D, T, itemsize)
    bb = _pick_batch_block(B, N, T, tn)

    grid = (B // bb, pl.cdiv(N, tn))

    if bb == 1:
        kernel = _scorer_dot_kernel_2d
        cand_spec = pl.BlockSpec((pl.Squeezed(), tn, D), lambda b, n: (b, n, 0))
        rel_spec = pl.BlockSpec((pl.Squeezed(), T, D), lambda b, n: (b, 0, 0))
        out_spec = pl.BlockSpec((pl.Squeezed(), T, tn), lambda b, n: (b, 0, n))
    else:
        kernel = _scorer_dot_kernel_batched
        cand_spec = pl.BlockSpec((bb, tn, D), lambda b, n: (b, n, 0))
        rel_spec = pl.BlockSpec((bb, T, D), lambda b, n: (b, 0, 0))
        out_spec = pl.BlockSpec((bb, T, tn), lambda b, n: (b, 0, n))

    # Double-buffered per-step VMEM footprint (+ f32 score tile) with headroom,
    # clamped to stay safe on v7x (64 MiB physical VMEM).
    footprint = 2 * itemsize * (bb * tn * D + bb * T * D + bb * T * tn) + 4 * bb * T * tn
    vmem_limit = int(min(48 * (1 << 20), max(32 * (1 << 20), 2 * footprint)))

    cost = pl.CostEstimate(
        flops=2 * B * N * T * D,
        transcendentals=0,
        bytes_accessed=itemsize * (B * N * D + B * T * D + B * N * T),
    )

    # Kernel emits the lane-dense transposed layout (B, T, N).
    out_tn = pl.pallas_call(
        kernel,
        out_shape=jax.ShapeDtypeStruct((B, T, N), dtype),
        grid_spec=pltpu.PrefetchScalarGridSpec(
            num_scalar_prefetch=0,
            grid=grid,
            in_specs=[cand_spec, rel_spec],
            out_specs=out_spec,
        ),
        compiler_params=pltpu.CompilerParams(
            dimension_semantics=("parallel", "parallel"),
            vmem_limit_bytes=vmem_limit,
        ),
        cost_estimate=cost,
    )(candidate_pair_rep, rel_type_rep)

    # Layout plumbing back to the module's (B, N, T) output.
    return jnp.swapaxes(out_tn, 1, 2)


# ---------------------------------------------------------------------------
# Self-test
# ---------------------------------------------------------------------------
if __name__ == "__main__":
    key = jax.random.PRNGKey(0)
    k1, k2, k3, k4, k5, k6 = jax.random.split(key, 6)

    # Test 1: small shapes consistent with the module's forward (exercises the
    # batch-blocked tiny-problem path).
    B, N, T, D = 2, 16, 8, 32
    cand_small = jax.random.normal(k1, (B, N, D), dtype=jnp.float32)
    rel_small = jax.random.normal(k2, (B, T, D), dtype=jnp.float32)

    out_small = jax.block_until_ready(scorer_layer_dot(cand_small, rel_small))
    ref_small = jnp.einsum("bnd,btd->bnt", cand_small, rel_small)
    assert out_small.shape == (B, N, T)
    assert jnp.allclose(out_small, ref_small, atol=1e-5, rtol=1e-5)

    # Test 2: larger, 128-aligned shapes (exercises the squeezed N-tiled path
    # with lane-dense (T, TN) output blocks).
    B2_, N2_, T2_, D2_ = 2, 1024, 8, 128
    cand_big = jax.random.normal(k3, (B2_, N2_, D2_), dtype=jnp.float32)
    rel_big = jax.random.normal(k4, (B2_, T2_, D2_), dtype=jnp.float32)

    out_big = jax.block_until_ready(scorer_layer_dot(cand_big, rel_big))
    ref_big = jnp.einsum("bnd,btd->bnt", cand_big, rel_big)
    assert out_big.shape == (B2_, N2_, T2_)
    assert jnp.allclose(out_big, ref_big, atol=1e-4, rtol=1e-4)

    # Test 3: N not a multiple of the tile (exercises the cdiv grid / partial
    # edge-block masking path).
    B3_, N3_, T3_, D3_ = 2, 192, 8, 128
    cand_odd = jax.random.normal(k5, (B3_, N3_, D3_), dtype=jnp.float32)
    rel_odd = jax.random.normal(k6, (B3_, T3_, D3_), dtype=jnp.float32)

    out_odd = jax.block_until_ready(scorer_layer_dot(cand_odd, rel_odd))
    ref_odd = jnp.einsum("bnd,btd->bnt", cand_odd, rel_odd)
    assert out_odd.shape == (B3_, N3_, T3_)
    assert jnp.allclose(out_odd, ref_odd, atol=1e-4, rtol=1e-4)

    print("KERNEL_OK")
</pallas_src>

<mosaic_0001>
module attributes {stable_mosaic.version = 11 : i64} {
  func.func @_scorer_dot_kernel_batched(%arg0: i32, %arg1: i32, %arg2: memref<2x16x32xf32, #tpu.memory_space<vmem>>, %arg3: memref<2x8x32xf32, #tpu.memory_space<vmem>>, %arg4: memref<2x8x16xf32, #tpu.memory_space<vmem>>) attributes {dimension_semantics = [#tpu.dimension_semantics<parallel>, #tpu.dimension_semantics<parallel>], iteration_bounds = array<i64: 1, 1>, scalar_prefetch = 0 : i64, scratch_operands = 0 : i64, tpu.core_type = #tpu.core_type<tc>, window_params = [{transform_indices = @transform_0, window_bounds = array<i64: 2, 16, 32>}, {transform_indices = @transform_1, window_bounds = array<i64: 2, 8, 32>}, {transform_indices = @transform_2, window_bounds = array<i64: 2, 8, 16>}]} {
    %c0 = arith.constant 0 : index
    %c0_0 = arith.constant 0 : index
    %c0_1 = arith.constant 0 : index
    %0 = vector.load %arg3[%c0, %c0_0, %c0_1] : memref<2x8x32xf32, #tpu.memory_space<vmem>>, vector<2x8x32xf32>
    %c0_2 = arith.constant 0 : index
    %c0_3 = arith.constant 0 : index
    %c0_4 = arith.constant 0 : index
    %1 = vector.load %arg2[%c0_2, %c0_3, %c0_4] : memref<2x16x32xf32, #tpu.memory_space<vmem>>, vector<2x16x32xf32>
    "tpu.trace_start"() <{level = 10 : i32, message = "btd,bnd->btn"}> : () -> ()
    %cst = arith.constant dense<0.000000e+00> : vector<2x8x16xf32>
    %2 = tpu.matmul %0, %1, %cst {dimension_numbers = #tpu.dot_dimension_numbers<[2], [2], [1], [1], [0, 0, 0, 1, 1, 1], [0], [0]>} : vector<2x8x32xf32>, vector<2x16x32xf32>, vector<2x8x16xf32> -> vector<2x8x16xf32>
    "tpu.trace_stop"() : () -> ()
    %c0_5 = arith.constant 0 : index
    %c0_6 = arith.constant 0 : index
    %c0_7 = arith.constant 0 : index
    %3 = vector.load %arg4[%c0_5, %c0_6, %c0_7] : memref<2x8x16xf32, #tpu.memory_space<vmem>>, vector<2x8x16xf32>
    tpu.vector_store %arg4[%c0_5, %c0_6, %c0_7], %2 {strides = array<i32>} : memref<2x8x16xf32, #tpu.memory_space<vmem>>, vector<2x8x16xf32>,
    return
  }
  func.func @transform_0(%arg0: i32, %arg1: i32) -> (i32, i32, i32) {
    %c0_i32 = arith.constant 0 : i32
    %c0_i32_0 = arith.constant 0 : i32
    return %arg0, %arg1, %c0_i32 : i32, i32, i32
  }
  func.func @transform_1(%arg0: i32, %arg1: i32) -> (i32, i32, i32) {
    %c0_i32 = arith.constant 0 : i32
    %c0_i32_0 = arith.constant 0 : i32
    %c0_i32_1 = arith.constant 0 : i32
    return %arg0, %c0_i32, %c0_i32_0 : i32, i32, i32
  }
  func.func @transform_2(%arg0: i32, %arg1: i32) -> (i32, i32, i32) {
    %c0_i32 = arith.constant 0 : i32
    %c0_i32_0 = arith.constant 0 : i32
    return %arg0, %c0_i32, %arg1 : i32, i32, i32
  }
}

</mosaic_0001>

<llo_original>
// kernel: scorer_layer_dot.1
$region0: #{scorer_layer_dot.1}
  #allocation0 [shape = 'u32[]', space=smem, size = 0x4, offset = 0x4, fixed_abs, tag = 'smem constant byte address 0x4 - core index']
  #allocation1 [shape = 'u32[144,128]{1,0:T(1,128)}', space=vmem, size = 0x12000, scoped, tag = 'internal scratch']
  %s0 = inlined_call_operand.hbm [shape: f32[2,16,32], index: 0, kind: input, shape index: {}]
  %s1 = inlined_call_operand.hbm [shape: f32[2,8,32], index: 1, kind: input, shape index: {}]
  %s2 = inlined_call_operand.hbm [shape: f32[2,8,16], index: 2, kind: output, shape index: {}]
  %s3 = sld [smem:[#allocation0]]
  $region26: #{scorer_layer_dot.1} parent=0
    _
  %s5 = ssub.s32 1, %s3
  %s6 = scalar_select 0, %s5, %s3
  $region1: #{scorer_layer_dot.1} parent=0
    #allocation2 [shape = 'u8[16384]{0}', space=vmem, size = 0x4000, scoped, tag = 'input window, operand 0, single buffered']
    #allocation3 [shape = 's32[1]{0}', space=sflag, size = 0x4, scoped, tag = 'scoped memory for scorer_layer_dot.1']
    #allocation4 [shape = 's32[1]{0}', space=sflag, size = 0x4, scoped, tag = 'scoped memory for scorer_layer_dot.1']
    #allocation5 [shape = 'u8[8192]{0}', space=vmem, size = 0x2000, scoped, tag = 'input window, operand 1, single buffered']
    #allocation6 [shape = 's32[1]{0}', space=sflag, size = 0x4, scoped, tag = 'scoped memory for scorer_layer_dot.1']
    #allocation7 [shape = 'u8[8192]{0}', space=vmem, size = 0x2000, scoped, tag = 'output window, operand 0, single buffered']
    %7 = vsyncpa [#allocation3], 0
    %8 = vsyncpa [#allocation6], 0
    %9 = vsyncpa [#allocation4], 0
    // Predicated region
    $region2: #{scorer_layer_dot.1} parent=1 // pred_check
      _
    $region3: #{scorer_layer_dot.1} parent=1 // pred_check_branch
      %11 = sbr.rel (0) target = $region5
    $region4: #{scorer_layer_dot.1} parent=1 // pred_region
      %s13 = ssub.s32 512, 512
      %14 = vsyncadd [#allocation3], %s13
      %s15 = sshll.u32 [#allocation2], 4
      %s16 = int_to_ptr.vmem [resolvable:$true] %s15
      %21 = dma.hbm_to_vmem [thread:$0]  %s0, 512, %s16, [#allocation3], 128, 128, 8
    $region5: #{scorer_layer_dot.1} parent=1 // pred_fallthru
      _
    // Predicated region
    $region6: #{scorer_layer_dot.1} parent=1 // pred_check
      _
    $region7: #{scorer_layer_dot.1} parent=1 // pred_check_branch
      %23 = sbr.rel (0) target = $region9
    $region8: #{scorer_layer_dot.1} parent=1 // pred_region
      %s25 = ssub.s32 256, 256
      %26 = vsyncadd [#allocation6], %s25
      %s27 = sshll.u32 [#allocation5], 4
      %s28 = int_to_ptr.vmem [resolvable:$true] %s27
      %33 = dma.hbm_to_vmem [thread:$0]  %s1, 256, %s28, [#allocation6], 128, 128, 8
    $region9: #{scorer_layer_dot.1} parent=1 // pred_fallthru
      _
    // Predicated region
    $region10: #{scorer_layer_dot.1} parent=1 // pred_check
      _
    $region11: #{scorer_layer_dot.1} parent=1 // pred_check_branch
      %35 = sbr.rel (0) target = $region13
    $region12: #{scorer_layer_dot.1} parent=1 // pred_region
      %36 = dma.done [#allocation3], 512
    $region13: #{scorer_layer_dot.1} parent=1 // pred_fallthru
      _
    // Predicated region
    $region14: #{scorer_layer_dot.1} parent=1 // pred_check
      _
    $region15: #{scorer_layer_dot.1} parent=1 // pred_check_branch
      %38 = sbr.rel (0) target = $region17
    $region16: #{scorer_layer_dot.1} parent=1 // pred_region
      %39 = dma.done [#allocation6], 256
    $region17: #{scorer_layer_dot.1} parent=1 // pred_fallthru
      _
    %v40 = vld [vmem:[#allocation5] sm:$0xff]
    %v41 = vld [vmem:[#allocation5 + $0x8] sm:$0xff]
    %v42 = vld [vmem:[#allocation2] sm:$0xff]
    %v43 = vld [vmem:[#allocation2 + $0x8] sm:$0xff]
    %v44 = vld [vmem:[#allocation2 + $0x10] sm:$0xff]
    %v45 = vld [vmem:[#allocation2 + $0x18] sm:$0xff]
    %vm46 = vcmask 261120
    %v48 = vsel %vm46, %v40, 0
    %v51 = vsel %vm46, %v42, 0
    %v54 = vsel %vm46, %v43, 0
    %56 = vmatprep.subr.mxu0 0.0
    %57 = vmatpush1.xpose.msra.mxu0 %v51
    %58 = vmatprep.subr.mxu0 0.0
    %59 = vmatpush1.xpose.msra.mxu0 %v54
    %60 = vmatprep.subr.mxu0 0.0
    %61 = vmatpush1.xpose.msra.mxu0 0.0
    %62 = vmatprep.subr.mxu0 0.0
    %63 = vmatpush1.xpose.msra.mxu0 0.0
    %64 = vmatprep.subr.mxu0 0.0
    %65 = vmatpush1.xpose.msra.mxu0 0.0
    %66 = vmatprep.subr.mxu0 0.0
    %67 = vmatpush1.xpose.msra.mxu0 0.0
    %68 = vmatprep.subr.mxu0 0.0
    %69 = vmatpush1.xpose.msra.mxu0 0.0
    %70 = vmatprep.subr.mxu0 0.0
    %71 = vmatpush1.xpose.msra.mxu0 0.0
    %72 = vmatprep.subr.mxu0 0.0
    %73 = vmatpush1.xpose.msra.mxu0 0.0
    %74 = vmatprep.subr.mxu0 0.0
    %75 = vmatpush1.xpose.msra.mxu0 0.0
    %76 = vmatprep.subr.mxu0 0.0
    %77 = vmatpush1.xpose.msra.mxu0 0.0
    %78 = vmatprep.subr.mxu0 0.0
    %79 = vmatpush1.xpose.msra.mxu0 0.0
    %80 = vmatprep.subr.mxu0 0.0
    %81 = vmatpush1.xpose.msra.mxu0 0.0
    %82 = vmatprep.subr.mxu0 0.0
    %83 = vmatpush1.xpose.msra.mxu0 0.0
    %84 = vmatprep.subr.mxu0 0.0
    %85 = vmatpush1.xpose.msra.mxu0 0.0
    %86 = vmatprep.subr.mxu0 0.0
    %87 = vmatpush1.xpose.msra.mxu0 0.0
    %88 = vmatprep.subr.mxu0 0.0
    %89 = vmatpush1.xpose.msra.mxu0 0.0
    %90 = vmatprep.subr.mxu0 0.0
    %91 = vmatpush1.xpose.msra.mxu0 0.0
    %92 = vmatprep.subr.mxu0 0.0
    %93 = vmatpush1.xpose.msra.mxu0 0.0
    %94 = vmatprep.subr.mxu0 0.0
    %95 = vmatpush1.xpose.msra.mxu0 0.0
    %96 = vmatprep.subr.mxu0 0.0
    %97 = vmatpush1.xpose.msra.mxu0 0.0
    %98 = vmatprep.subr.mxu0 0.0
    %99 = vmatpush1.xpose.msra.mxu0 0.0
    %100 = vmatprep.subr.mxu0 0.0
    %101 = vmatpush1.xpose.msra.mxu0 0.0
    %102 = vmatprep.subr.mxu0 0.0
    %103 = vmatpush1.xpose.msra.mxu0 0.0
    %104 = vmatprep.subr.mxu0 0.0
    %105 = vmatpush1.xpose.msra.mxu0 0.0
    %106 = vmatprep.subr.mxu0 0.0
    %107 = vmatpush1.xpose.msra.mxu0 0.0
    %108 = vmatprep.subr.mxu0 0.0
    %109 = vmatpush1.xpose.msra.mxu0 0.0
    %110 = vmatprep.subr.mxu0 0.0
    %111 = vmatpush1.xpose.msra.mxu0 0.0
    %112 = vmatprep.subr.mxu0 0.0
    %113 = vmatpush1.xpose.msra.mxu0 0.0
    %114 = vmatprep.subr.mxu0 0.0
    %115 = vmatpush1.xpose.msra.mxu0 0.0
    %116 = vmatprep.subr.mxu0 0.0
    %117 = vmatpush1.xpose.msra.mxu0 0.0
    %118 = vmatprep.subr.mxu0 0.0
    %119 = vmatpush1.xpose.msra.mxu0 0.0
    %120 = vmatprep.mubr.f32.mxu0 0.0
    %121 = vmatmul.mubr.f32.gmra.mrb[0].mxu0 %v48
    %v122 = vpop.f32.mrb[0].mxu0
    %v123 = vadd.f32 0.0, %v122
    %v124 = vpop.f32.mrb[0].mxu0
    %125 = vdwg.mxu0
    %v127 = vsel %vm46, %v41, 0
    %v130 = vsel %vm46, %v44, 0
    %v133 = vsel %vm46, %v45, 0
    %135 = vmatprep.subr.mxu0 0.0
    %136 = vmatpush1.xpose.msra.mxu0 %v130
    %137 = vmatprep.subr.mxu0 0.0
    %138 = vmatpush1.xpose.msra.mxu0 %v133
    %139 = vmatprep.subr.mxu0 0.0
    %140 = vmatpush1.xpose.msra.mxu0 0.0
    %141 = vmatprep.subr.mxu0 0.0
    %142 = vmatpush1.xpose.msra.mxu0 0.0
    %143 = vmatprep.subr.mxu0 0.0
    %144 = vmatpush1.xpose.msra.mxu0 0.0
    %145 = vmatprep.subr.mxu0 0.0
    %146 = vmatpush1.xpose.msra.mxu0 0.0
    %147 = vmatprep.subr.mxu0 0.0
    %148 = vmatpush1.xpose.msra.mxu0 0.0
    %149 = vmatprep.subr.mxu0 0.0
    %150 = vmatpush1.xpose.msra.mxu0 0.0
    %151 = vmatprep.subr.mxu0 0.0
    %152 = vmatpush1.xpose.msra.mxu0 0.0
    %153 = vmatprep.subr.mxu0 0.0
    %154 = vmatpush1.xpose.msra.mxu0 0.0
    %155 = vmatprep.subr.mxu0 0.0
    %156 = vmatpush1.xpose.msra.mxu0 0.0
    %157 = vmatprep.subr.mxu0 0.0
    %158 = vmatpush1.xpose.msra.mxu0 0.0
    %159 = vmatprep.subr.mxu0 0.0
    %160 = vmatpush1.xpose.msra.mxu0 0.0
    %161 = vmatprep.subr.mxu0 0.0
    %162 = vmatpush1.xpose.msra.mxu0 0.0
    %163 = vmatprep.subr.mxu0 0.0
    %164 = vmatpush1.xpose.msra.mxu0 0.0
    %165 = vmatprep.subr.mxu0 0.0
    %166 = vmatpush1.xpose.msra.mxu0 0.0
    %167 = vmatprep.subr.mxu0 0.0
    %168 = vmatpush1.xpose.msra.mxu0 0.0
    %169 = vmatprep.subr.mxu0 0.0
    %170 = vmatpush1.xpose.msra.mxu0 0.0
    %171 = vmatprep.subr.mxu0 0.0
    %172 = vmatpush1.xpose.msra.mxu0 0.0
    %173 = vmatprep.subr.mxu0 0.0
    %174 = vmatpush1.xpose.msra.mxu0 0.0
    %175 = vmatprep.subr.mxu0 0.0
    %176 = vmatpush1.xpose.msra.mxu0 0.0
    %177 = vmatprep.subr.mxu0 0.0
    %178 = vmatpush1.xpose.msra.mxu0 0.0
    %179 = vmatprep.subr.mxu0 0.0
    %180 = vmatpush1.xpose.msra.mxu0 0.0
    %181 = vmatprep.subr.mxu0 0.0
    %182 = vmatpush1.xpose.msra.mxu0 0.0
    %183 = vmatprep.subr.mxu0 0.0
    %184 = vmatpush1.xpose.msra.mxu0 0.0
    %185 = vmatprep.subr.mxu0 0.0
    %186 = vmatpush1.xpose.msra.mxu0 0.0
    %187 = vmatprep.subr.mxu0 0.0
    %188 = vmatpush1.xpose.msra.mxu0 0.0
    %189 = vmatprep.subr.mxu0 0.0
    %190 = vmatpush1.xpose.msra.mxu0 0.0
    %191 = vmatprep.subr.mxu0 0.0
    %192 = vmatpush1.xpose.msra.mxu0 0.0
    %193 = vmatprep.subr.mxu0 0.0
    %194 = vmatpush1.xpose.msra.mxu0 0.0
    %195 = vmatprep.subr.mxu0 0.0
    %196 = vmatpush1.xpose.msra.mxu0 0.0
    %197 = vmatprep.subr.mxu0 0.0
    %198 = vmatpush1.xpose.msra.mxu0 0.0
    %199 = vmatprep.mubr.f32.mxu0 0.0
    %200 = vmatmul.mubr.f32.gmra.mrb[0].mxu0 %v127
    %v201 = vpop.f32.mrb[0].mxu0
    %v202 = vadd.f32 0.0, %v201
    %v203 = vpop.f32.mrb[0].mxu0
    %204 = vdwg.mxu0
    %vm205 = vcmask 130048
    %206 = vst.msk [vmem:[#allocation7] sm:$0xff] %vm205, %v123
    %207 = vst.msk [vmem:[#allocation7 + $0x8] sm:$0xff] %vm205, %v202
    // Predicated region
    $region18: #{scorer_layer_dot.1} parent=1 // pred_check
      _
    $region19: #{scorer_layer_dot.1} parent=1 // pred_check_branch
      %209 = sbr.rel (0) target = $region21
    $region20: #{scorer_layer_dot.1} parent=1 // pred_region
      %s211 = ssub.s32 256, 256
      %212 = vsyncadd [#allocation4], %s211
      %s213 = sshll.u32 [#allocation7], 4
      %s214 = int_to_ptr.vmem [resolvable:$true] %s213
      %219 = dma.vmem_to_hbm [thread:$0]  %s214, 256, %s2, [#allocation4], 128, 128, 8
    $region21: #{scorer_layer_dot.1} parent=1 // pred_fallthru
      _
    // Predicated region
    $region22: #{scorer_layer_dot.1} parent=1 // pred_check
      _
    $region23: #{scorer_layer_dot.1} parent=1 // pred_check_branch
      %221 = sbr.rel (0) target = $region25
    $region24: #{scorer_layer_dot.1} parent=1 // pred_region
      %222 = dma.done [#allocation4], 256
    $region25: #{scorer_layer_dot.1} parent=1 // pred_fallthru
      _
    %223 = vsyncpa [#allocation3], 1
    %224 = vsyncpa [#allocation6], 1
    %225 = vsyncpa [#allocation4], 1

</llo_original>
